<compile_context>
chip_gen: v7x
topology: tpu7x:2x2x1
jax: 0.10.0
libtpu: 0.0.40
codegen_flags: <defaults>
</compile_context>

<pallas_src>
import functools

import jax
import jax.numpy as jnp
from jax import lax
from jax.experimental import pallas as pl
from jax.experimental.pallas import tpu as pltpu

EPS = 1e-5
NEG_SLOPE = 0.01


def _double_conv_kernel(
    x_ref,       # (N*H, 3*W*Cin)   conv1 lhs: ky-shifted slabs concatenated along K
    w1_ref,      # (3*W*Cin,  W*Cmid)  conv1 ky-stacked banded weights
    w2_ref,      # (3*W*Cmid, W*Cout)  conv2 ky-stacked banded weights
    g1_ref,      # (1, W*Cmid)  BN1 gamma, tiled per lane
    be1_ref,     # (1, W*Cmid)  BN1 beta
    g2_ref,      # (1, W*Cout)
    be2_ref,     # (1, W*Cout)
    mup_ref,     # (N*H, 1)  0.0 where h == 0    (row h-1 neighbour invalid)
    mdn_ref,     # (N*H, 1)  0.0 where h == H-1  (row h+1 neighbour invalid)
    *gs_and_out,  # 1 or 2 channel group-sum matrices (W*C, W*C), then out_ref
    inv_cnt,     # 1.0 / (N*H*W)
):
  *gs_refs, out_ref = gs_and_out
  gs1_ref = gs_refs[0]
  gs2_ref = gs_refs[-1]   # same ref as gs1 when Cmid == Cout (deduped operand)

  def bn_lrelu(acc, gs_ref, g_ref, be_ref):
    # Fused train-mode BN + LeakyReLU: one pass for sum / sum-of-squares (XLU
    # column reductions, stacked so the group reduce is a single small matmul),
    # gamma*rsqrt(var+eps) folded into one scale/shift.
    stats = jnp.sum(jnp.stack([acc, acc * acc]), axis=1)          # (2, WC)
    red = jnp.dot(stats, gs_ref[...],
                  preferred_element_type=jnp.float32) * inv_cnt
    mean = red[0:1, :]
    var = red[1:2, :] - mean * mean   # biased var (E[x^2]-mean^2; fine here)
    scale = g_ref[...] * lax.rsqrt(var + EPS)
    shift = be_ref[...] - mean * scale
    y = acc * scale + shift
    return jnp.where(y > 0, y, NEG_SLOPE * y)

  # ---- conv1: single MXU matmul (ky taps along K, kx + W-pad in the band).
  # Conv bias omitted: cancelled exactly by the BN mean subtraction below.
  acc1 = jnp.dot(x_ref[...], w1_ref[...], preferred_element_type=jnp.float32)
  y1 = bn_lrelu(acc1, gs1_ref, g1_ref, be1_ref)

  # ---- conv2: y1 stays in vregs.  The +-1-row shifted operands use the XLU
  # roll slot; per-image H boundaries are zeroed with the row masks.
  nh = y1.shape[0]
  up = pltpu.roll(y1, shift=1, axis=0) * mup_ref[...]        # row h-1 (ky=0)
  dn = pltpu.roll(y1, shift=nh - 1, axis=0) * mdn_ref[...]   # row h+1 (ky=2), == shift -1
  lhs2 = jnp.concatenate([up, y1, dn], axis=1)               # (NH, 3*W*Cmid)
  acc2 = jnp.dot(lhs2, w2_ref[...], preferred_element_type=jnp.float32)
  out_ref[...] = bn_lrelu(acc2, gs2_ref, g2_ref, be2_ref)


def _banded_weights(w_hwio, W):
  """(3,3,Ci,Co) HWIO conv weights -> (3*W*Ci, W*Co) ky-stacked banded matrix.

  band_ky[(x+dx)*Ci + ci, x*Co + co] = w[ky, dx+1, ci, co] for dx in {-1,0,1};
  out-of-range x+dx entries are dropped (== 'SAME' zero padding along W).  The
  3 ky bands are stacked along axis 0 to match the ky-concatenated lhs.
  """
  _, _, Ci, Co = w_hwio.shape
  bands = []
  for ky in range(3):
    b = jnp.zeros((W * Ci, W * Co), jnp.float32)
    for kx in range(3):
      dx = kx - 1
      sel = jnp.eye(W, W, k=-dx, dtype=jnp.float32)   # sel[xs, x] = (xs == x+dx)
      b = b + jnp.kron(sel, w_hwio[ky, kx].astype(jnp.float32))
    bands.append(b)
  return jnp.concatenate(bands, axis=0)               # (3*W*Ci, W*Co)


def _group_sum(W, C):
  # (s @ gs)[w*C + c] = sum_{w'} s[w'*C + c]  : reduce + re-broadcast over W groups.
  return jnp.kron(jnp.ones((W, W), jnp.float32), jnp.eye(C, dtype=jnp.float32))


def double_conv_pallas(x_nchw, params):
  """x_nchw: (N, Cin, H, W) float32.  Returns (N, Cout, H, W) float32."""
  (w1, b1, g1, be1, w2, b2, g2, be2) = params
  del b1, b2  # conv biases are mathematically cancelled by train-mode BN
  N, Cin, H, W = x_nchw.shape
  Cmid = w1.shape[-1]
  Cout = w2.shape[-1]
  NH = N * H

  # glue: NCHW -> lane-dense slabs.  conv1's lhs (ky-shifted rows concatenated
  # along K, with zero rows at the H edges) is prepared here — pure layout
  # plumbing, 3x a tiny input, and removes all in-kernel copies for conv1.
  x_nhwc = jnp.transpose(x_nchw, (0, 2, 3, 1)).astype(jnp.float32)   # (N,H,W,Cin)
  xp = jnp.pad(x_nhwc, ((0, 0), (1, 1), (0, 0), (0, 0)))             # (N,H+2,W,Cin)
  x_cat = jnp.concatenate(
      [xp[:, ky:ky + H].reshape(NH, W * Cin) for ky in range(3)], axis=1)

  w1s = _banded_weights(w1, W)          # (3*W*Cin,  W*Cmid)
  w2s = _banded_weights(w2, W)          # (3*W*Cmid, W*Cout)

  # per-lane BN affine params (channel vector tiled across the W groups)
  g1t = jnp.tile(g1.astype(jnp.float32), W).reshape(1, W * Cmid)
  be1t = jnp.tile(be1.astype(jnp.float32), W).reshape(1, W * Cmid)
  g2t = jnp.tile(g2.astype(jnp.float32), W).reshape(1, W * Cout)
  be2t = jnp.tile(be2.astype(jnp.float32), W).reshape(1, W * Cout)

  # per-image H-boundary row masks for the in-kernel roll of y1
  h_idx = jnp.arange(NH, dtype=jnp.int32) % H
  m_up = (h_idx != 0).astype(jnp.float32).reshape(NH, 1)
  m_dn = (h_idx != H - 1).astype(jnp.float32).reshape(NH, 1)

  # channel group-sum matrix; shared between BN1/BN2 when Cmid == Cout
  if Cmid == Cout:
    gs_ops = (_group_sum(W, Cmid),)
  else:
    gs_ops = (_group_sum(W, Cmid), _group_sum(W, Cout))

  kernel = functools.partial(_double_conv_kernel, inv_cnt=1.0 / float(N * H * W))

  # No grid: everything (< 0.5 MiB) is VMEM-resident for one invocation, so the
  # default full-array BlockSpecs are the correct choice here.
  out2d = pl.pallas_call(
      kernel,
      out_shape=jax.ShapeDtypeStruct((NH, W * Cout), jnp.float32),
  )(x_cat, w1s, w2s, g1t, be1t, g2t, be2t, m_up, m_dn, *gs_ops)

  # lane-dense slab -> NCHW
  return jnp.transpose(out2d.reshape(N, H, W, Cout), (0, 3, 1, 2))


# --------------------------- pure-JAX reference ------------------------------
def double_conv_ref(x_nchw, params):
  (w1, b1, g1, be1, w2, b2, g2, be2) = params
  x = jnp.transpose(x_nchw, (0, 2, 3, 1)).astype(jnp.float32)

  def block(x, w_hwio, b, g, be):
    y = lax.conv_general_dilated(
        x, w_hwio, (1, 1), 'SAME',
        dimension_numbers=('NHWC', 'HWIO', 'NHWC')) + b
    m = y.mean(axis=(0, 1, 2))
    v = ((y - m) ** 2).mean(axis=(0, 1, 2))
    y = (y - m) * lax.rsqrt(v + EPS) * g + be
    return jnp.where(y > 0, y, NEG_SLOPE * y)

  y = block(x, w1, b1, g1, be1)
  y = block(y, w2, b2, g2, be2)
  return jnp.transpose(y, (0, 3, 1, 2))


if __name__ == "__main__":
  # DoubleConv(in_channels=4, out_channels=8)  -> mid_channels = 8
  N, Cin, H, W = 2, 4, 16, 16
  Cmid, Cout = 8, 8

  key = jax.random.PRNGKey(0)
  ks = jax.random.split(key, 9)
  x = jax.random.normal(ks[0], (N, Cin, H, W), jnp.float32)

  # deterministic synthetic parameters (conv weights in HWIO)
  w1 = jax.random.normal(ks[1], (3, 3, Cin, Cmid), jnp.float32) * 0.2
  b1 = jax.random.normal(ks[2], (Cmid,), jnp.float32) * 0.1
  g1 = 1.0 + 0.1 * jax.random.normal(ks[3], (Cmid,), jnp.float32)
  be1 = 0.1 * jax.random.normal(ks[4], (Cmid,), jnp.float32)
  w2 = jax.random.normal(ks[5], (3, 3, Cmid, Cout), jnp.float32) * 0.2
  b2 = jax.random.normal(ks[6], (Cout,), jnp.float32) * 0.1
  g2 = 1.0 + 0.1 * jax.random.normal(ks[7], (Cout,), jnp.float32)
  be2 = 0.1 * jax.random.normal(ks[8], (Cout,), jnp.float32)
  params = (w1, b1, g1, be1, w2, b2, g2, be2)

  out = jax.block_until_ready(double_conv_pallas(x, params))
  ref = jax.block_until_ready(double_conv_ref(x, params))

  assert out.shape == (N, Cout, H, W), out.shape
  assert jnp.allclose(out, ref, atol=1e-3, rtol=1e-3), float(
      jnp.max(jnp.abs(out - ref)))

  print("KERNEL_OK")
</pallas_src>

<mosaic_0001>
module attributes {stable_mosaic.version = 11 : i64} {
  func.func @_double_conv_kernel(%arg0: memref<32x192xf32, #tpu.memory_space<vmem>>, %arg1: memref<192x128xf32, #tpu.memory_space<vmem>>, %arg2: memref<384x128xf32, #tpu.memory_space<vmem>>, %arg3: memref<1x128xf32, #tpu.memory_space<vmem>>, %arg4: memref<1x128xf32, #tpu.memory_space<vmem>>, %arg5: memref<1x128xf32, #tpu.memory_space<vmem>>, %arg6: memref<1x128xf32, #tpu.memory_space<vmem>>, %arg7: memref<32x1xf32, #tpu.memory_space<vmem>>, %arg8: memref<32x1xf32, #tpu.memory_space<vmem>>, %arg9: memref<128x128xf32, #tpu.memory_space<vmem>>, %arg10: memref<32x128xf32, #tpu.memory_space<vmem>>) attributes {dimension_semantics = [], scalar_prefetch = 0 : i64, scratch_operands = 0 : i64, tpu.core_type = #tpu.core_type<tc>} {
    %c0 = arith.constant 0 : index
    %c0_0 = arith.constant 0 : index
    %0 = vector.load %arg0[%c0, %c0_0] : memref<32x192xf32, #tpu.memory_space<vmem>>, vector<32x192xf32>
    %c0_1 = arith.constant 0 : index
    %c0_2 = arith.constant 0 : index
    %1 = vector.load %arg1[%c0_1, %c0_2] : memref<192x128xf32, #tpu.memory_space<vmem>>, vector<192x128xf32>
    %cst = arith.constant dense<0.000000e+00> : vector<32x128xf32>
    %2 = tpu.matmul %0, %1, %cst {dimension_numbers = #tpu.dot_dimension_numbers<[1], [0], [0], [1], [0, 0, 1, 1], [], []>} : vector<32x192xf32>, vector<192x128xf32>, vector<32x128xf32> -> vector<32x128xf32>
    %3 = arith.mulf %2, %2 : vector<32x128xf32>
    %4 = vector.shape_cast %2 : vector<32x128xf32> to vector<1x32x128xf32>
    %5 = vector.shape_cast %3 : vector<32x128xf32> to vector<1x32x128xf32>
    %6 = tpu.concatenate %4, %5 in 0 : vector<1x32x128xf32>, vector<1x32x128xf32> -> vector<2x32x128xf32>
    %cst_3 = arith.constant dense<0.000000e+00> : vector<2x128xf32>
    %7 = vector.multi_reduction <add>, %6, %cst_3 [1] : vector<2x32x128xf32> to vector<2x128xf32>
    %c0_4 = arith.constant 0 : index
    %c0_5 = arith.constant 0 : index
    %8 = vector.load %arg9[%c0_4, %c0_5] : memref<128x128xf32, #tpu.memory_space<vmem>>, vector<128x128xf32>
    %cst_6 = arith.constant dense<0.000000e+00> : vector<2x128xf32>
    %9 = tpu.matmul %7, %8, %cst_6 {dimension_numbers = #tpu.dot_dimension_numbers<[1], [0], [0], [1], [0, 0, 1, 1], [], []>} : vector<2x128xf32>, vector<128x128xf32>, vector<2x128xf32> -> vector<2x128xf32>
    %cst_7 = arith.constant 0.001953125 : f32
    %10 = vector.broadcast %cst_7 : f32 to vector<2x128xf32>
    %11 = arith.mulf %9, %10 : vector<2x128xf32>
    %12 = vector.extract_strided_slice %11 {offsets = [0, 0], sizes = [1, 128], strides = [1, 1]} : vector<2x128xf32> to vector<1x128xf32>
    %13 = vector.extract_strided_slice %11 {offsets = [1, 0], sizes = [1, 128], strides = [1, 1]} : vector<2x128xf32> to vector<1x128xf32>
    %14 = arith.mulf %12, %12 : vector<1x128xf32>
    %15 = arith.subf %13, %14 : vector<1x128xf32>
    %c0_8 = arith.constant 0 : index
    %c0_9 = arith.constant 0 : index
    %16 = vector.load %arg3[%c0_8, %c0_9] : memref<1x128xf32, #tpu.memory_space<vmem>>, vector<1x128xf32>
    %cst_10 = arith.constant 9.99999974E-6 : f32
    %17 = vector.broadcast %cst_10 : f32 to vector<1x128xf32>
    %18 = arith.addf %15, %17 : vector<1x128xf32>
    %19 = math.rsqrt %18 : vector<1x128xf32>
    %20 = arith.mulf %16, %19 : vector<1x128xf32>
    %c0_11 = arith.constant 0 : index
    %c0_12 = arith.constant 0 : index
    %21 = vector.load %arg4[%c0_11, %c0_12] : memref<1x128xf32, #tpu.memory_space<vmem>>, vector<1x128xf32>
    %22 = arith.mulf %12, %20 : vector<1x128xf32>
    %23 = arith.subf %21, %22 : vector<1x128xf32>
    %24 = vector.broadcast %20 : vector<1x128xf32> to vector<32x128xf32>
    %25 = arith.mulf %2, %24 : vector<32x128xf32>
    %26 = vector.broadcast %23 : vector<1x128xf32> to vector<32x128xf32>
    %27 = arith.addf %25, %26 : vector<32x128xf32>
    %cst_13 = arith.constant 0.000000e+00 : f32
    %28 = vector.broadcast %cst_13 : f32 to vector<32x128xf32>
    %29 = arith.cmpf ogt, %27, %28 : vector<32x128xf32>
    %cst_14 = arith.constant 0.00999999977 : f32
    %30 = vector.broadcast %cst_14 : f32 to vector<32x128xf32>
    %31 = arith.mulf %30, %27 : vector<32x128xf32>
    %32 = arith.select %29, %27, %31 : vector<32x128xi1>, vector<32x128xf32>
    %c1_i32 = arith.constant 1 : i32
    %33 = tpu.dynamic_rotate %32 by %c1_i32 dim 0 : vector<32x128xf32>, i32 -> vector<32x128xf32>
    %c0_15 = arith.constant 0 : index
    %c0_16 = arith.constant 0 : index
    %34 = vector.load %arg7[%c0_15, %c0_16] : memref<32x1xf32, #tpu.memory_space<vmem>>, vector<32x1xf32>
    %35 = vector.broadcast %34 : vector<32x1xf32> to vector<32x128xf32>
    %36 = arith.mulf %33, %35 : vector<32x128xf32>
    %c31_i32 = arith.constant 31 : i32
    %37 = tpu.dynamic_rotate %32 by %c31_i32 dim 0 : vector<32x128xf32>, i32 -> vector<32x128xf32>
    %c0_17 = arith.constant 0 : index
    %c0_18 = arith.constant 0 : index
    %38 = vector.load %arg8[%c0_17, %c0_18] : memref<32x1xf32, #tpu.memory_space<vmem>>, vector<32x1xf32>
    %39 = vector.broadcast %38 : vector<32x1xf32> to vector<32x128xf32>
    %40 = arith.mulf %37, %39 : vector<32x128xf32>
    %41 = tpu.concatenate %36, %32, %40 in 1 : vector<32x128xf32>, vector<32x128xf32>, vector<32x128xf32> -> vector<32x384xf32>
    %c0_19 = arith.constant 0 : index
    %c0_20 = arith.constant 0 : index
    %42 = vector.load %arg2[%c0_19, %c0_20] : memref<384x128xf32, #tpu.memory_space<vmem>>, vector<384x128xf32>
    %cst_21 = arith.constant dense<0.000000e+00> : vector<32x128xf32>
    %43 = tpu.matmul %41, %42, %cst_21 {dimension_numbers = #tpu.dot_dimension_numbers<[1], [0], [0], [1], [0, 0, 1, 1], [], []>} : vector<32x384xf32>, vector<384x128xf32>, vector<32x128xf32> -> vector<32x128xf32>
    %44 = arith.mulf %43, %43 : vector<32x128xf32>
    %45 = vector.shape_cast %43 : vector<32x128xf32> to vector<1x32x128xf32>
    %46 = vector.shape_cast %44 : vector<32x128xf32> to vector<1x32x128xf32>
    %47 = tpu.concatenate %45, %46 in 0 : vector<1x32x128xf32>, vector<1x32x128xf32> -> vector<2x32x128xf32>
    %cst_22 = arith.constant dense<0.000000e+00> : vector<2x128xf32>
    %48 = vector.multi_reduction <add>, %47, %cst_22 [1] : vector<2x32x128xf32> to vector<2x128xf32>
    %c0_23 = arith.constant 0 : index
    %c0_24 = arith.constant 0 : index
    %49 = vector.load %arg9[%c0_23, %c0_24] : memref<128x128xf32, #tpu.memory_space<vmem>>, vector<128x128xf32>
    %cst_25 = arith.constant dense<0.000000e+00> : vector<2x128xf32>
    %50 = tpu.matmul %48, %49, %cst_25 {dimension_numbers = #tpu.dot_dimension_numbers<[1], [0], [0], [1], [0, 0, 1, 1], [], []>} : vector<2x128xf32>, vector<128x128xf32>, vector<2x128xf32> -> vector<2x128xf32>
    %cst_26 = arith.constant 0.001953125 : f32
    %51 = vector.broadcast %cst_26 : f32 to vector<2x128xf32>
    %52 = arith.mulf %50, %51 : vector<2x128xf32>
    %53 = vector.extract_strided_slice %52 {offsets = [0, 0], sizes = [1, 128], strides = [1, 1]} : vector<2x128xf32> to vector<1x128xf32>
    %54 = vector.extract_strided_slice %52 {offsets = [1, 0], sizes = [1, 128], strides = [1, 1]} : vector<2x128xf32> to vector<1x128xf32>
    %55 = arith.mulf %53, %53 : vector<1x128xf32>
    %56 = arith.subf %54, %55 : vector<1x128xf32>
    %c0_27 = arith.constant 0 : index
    %c0_28 = arith.constant 0 : index
    %57 = vector.load %arg5[%c0_27, %c0_28] : memref<1x128xf32, #tpu.memory_space<vmem>>, vector<1x128xf32>
    %cst_29 = arith.constant 9.99999974E-6 : f32
    %58 = vector.broadcast %cst_29 : f32 to vector<1x128xf32>
    %59 = arith.addf %56, %58 : vector<1x128xf32>
    %60 = math.rsqrt %59 : vector<1x128xf32>
    %61 = arith.mulf %57, %60 : vector<1x128xf32>
    %c0_30 = arith.constant 0 : index
    %c0_31 = arith.constant 0 : index
    %62 = vector.load %arg6[%c0_30, %c0_31] : memref<1x128xf32, #tpu.memory_space<vmem>>, vector<1x128xf32>
    %63 = arith.mulf %53, %61 : vector<1x128xf32>
    %64 = arith.subf %62, %63 : vector<1x128xf32>
    %65 = vector.broadcast %61 : vector<1x128xf32> to vector<32x128xf32>
    %66 = arith.mulf %43, %65 : vector<32x128xf32>
    %67 = vector.broadcast %64 : vector<1x128xf32> to vector<32x128xf32>
    %68 = arith.addf %66, %67 : vector<32x128xf32>
    %cst_32 = arith.constant 0.000000e+00 : f32
    %69 = vector.broadcast %cst_32 : f32 to vector<32x128xf32>
    %70 = arith.cmpf ogt, %68, %69 : vector<32x128xf32>
    %cst_33 = arith.constant 0.00999999977 : f32
    %71 = vector.broadcast %cst_33 : f32 to vector<32x128xf32>
    %72 = arith.mulf %71, %68 : vector<32x128xf32>
    %73 = arith.select %70, %68, %72 : vector<32x128xi1>, vector<32x128xf32>
    %c0_34 = arith.constant 0 : index
    %c0_35 = arith.constant 0 : index
    %74 = vector.load %arg10[%c0_34, %c0_35] : memref<32x128xf32, #tpu.memory_space<vmem>>, vector<32x128xf32>
    tpu.vector_store %arg10[%c0_34, %c0_35], %73 {strides = array<i32>} : memref<32x128xf32, #tpu.memory_space<vmem>>, vector<32x128xf32>,
    return
  }
}

</mosaic_0001>

<llo_original>
// kernel: tpu_custom_call.1
$region0: #{tpu_custom_call.1}
  #allocation0 [shape = 'u32[]', space=smem, size = 0x4, offset = 0x4, fixed_abs, tag = 'smem constant byte address 0x4 - core index']
  #allocation1 [shape = 'u32[144,128]{1,0:T(1,128)}', space=vmem, size = 0x12000, scoped, tag = 'internal scratch']
  %s0 = inlined_call_operand.vmem [shape: f32[32,192], index: 0, kind: input, shape index: {}]
  %s1 = inlined_call_operand.hbm [shape: f32[192,128], index: 1, kind: input, shape index: {}]
  %s2 = inlined_call_operand.hbm [shape: f32[384,128], index: 2, kind: input, shape index: {}]
  %s3 = inlined_call_operand.vmem [shape: f32[1,128], index: 3, kind: input, shape index: {}]
  %s4 = inlined_call_operand.vmem [shape: f32[1,128], index: 4, kind: input, shape index: {}]
  %s5 = inlined_call_operand.vmem [shape: f32[1,128], index: 5, kind: input, shape index: {}]
  %s6 = inlined_call_operand.vmem [shape: f32[1,128], index: 6, kind: input, shape index: {}]
  %s7 = inlined_call_operand.vmem [shape: f32[32,1], index: 7, kind: input, shape index: {}]
  %s8 = inlined_call_operand.vmem [shape: f32[32,1], index: 8, kind: input, shape index: {}]
  %s9 = inlined_call_operand.hbm [shape: f32[128,128], index: 9, kind: input, shape index: {}]
  %s10 = inlined_call_operand.hbm [shape: f32[32,128], index: 10, kind: output, shape index: {}]
  %s11 = sld [smem:[#allocation0]]
  $region62: #{tpu_custom_call.1} parent=0
    _
  %s13 = ssub.s32 1, %s11
  %s14 = scalar_select 0, %s13, %s11
  $region1: #{tpu_custom_call.1} parent=0
    #allocation2 [shape = 'u8[98304]{0}', space=vmem, size = 0x18000, scoped, tag = 'input window, operand 1, single buffered']
    #allocation3 [shape = 's32[1]{0}', space=sflag, size = 0x4, scoped, tag = 'scoped memory for tpu_custom_call.1']
    #allocation4 [shape = 's32[1]{0}', space=sflag, size = 0x4, scoped, tag = 'scoped memory for tpu_custom_call.1']
    #allocation5 [shape = 'u8[196608]{0}', space=vmem, size = 0x30000, scoped, tag = 'input window, operand 2, single buffered']
    #allocation6 [shape = 's32[1]{0}', space=sflag, size = 0x4, scoped, tag = 'scoped memory for tpu_custom_call.1']
    #allocation7 [shape = 'u8[65536]{0}', space=vmem, size = 0x10000, scoped, tag = 'input window, operand 9, single buffered']
    #allocation8 [shape = 'u8[16384]{0}', space=vmem, size = 0x4000, scoped, tag = 'output window, operand 0, single buffered']
    %15 = vsyncpa [#allocation3], 0
    %16 = vsyncpa [#allocation6], 0
    %17 = vsyncpa [#allocation4], 0
    // Predicated region
    $region2: #{tpu_custom_call.1} parent=1 // pred_check
      _
    $region3: #{tpu_custom_call.1} parent=1 // pred_check_branch
      %19 = sbr.rel (0) target = $region5
    $region4: #{tpu_custom_call.1} parent=1 // pred_region
      _
    $region5: #{tpu_custom_call.1} parent=1 // pred_fallthru
      _
    // Predicated region
    $region6: #{tpu_custom_call.1} parent=1 // pred_check
      _
    $region7: #{tpu_custom_call.1} parent=1 // pred_check_branch
      %21 = sbr.rel (0) target = $region9
    $region8: #{tpu_custom_call.1} parent=1 // pred_region
      %s23 = ssub.s32 3072, 3072
      %24 = vsyncadd [#allocation3], %s23
      %s25 = sshll.u32 [#allocation2], 4
      %s26 = int_to_ptr.vmem [resolvable:$true] %s25
      %31 = dma.hbm_to_vmem [thread:$0]  %s1, 3072, %s26, [#allocation3], 128, 128, 8
    $region9: #{tpu_custom_call.1} parent=1 // pred_fallthru
      _
    // Predicated region
    $region10: #{tpu_custom_call.1} parent=1 // pred_check
      _
    $region11: #{tpu_custom_call.1} parent=1 // pred_check_branch
      %33 = sbr.rel (0) target = $region13
    $region12: #{tpu_custom_call.1} parent=1 // pred_region
      %s35 = ssub.s32 6144, 6144
      %36 = vsyncadd [#allocation6], %s35
      %s37 = sshll.u32 [#allocation5], 4
      %s38 = int_to_ptr.vmem [resolvable:$true] %s37
      %43 = dma.hbm_to_vmem [thread:$0]  %s2, 6144, %s38, [#allocation6], 128, 128, 8
    $region13: #{tpu_custom_call.1} parent=1 // pred_fallthru
      _
    // Predicated region
    $region14: #{tpu_custom_call.1} parent=1 // pred_check
      _
    $region15: #{tpu_custom_call.1} parent=1 // pred_check_branch
      %45 = sbr.rel (0) target = $region17
    $region16: #{tpu_custom_call.1} parent=1 // pred_region
      _
    $region17: #{tpu_custom_call.1} parent=1 // pred_fallthru
      _
    // Predicated region
    $region18: #{tpu_custom_call.1} parent=1 // pred_check
      _
    $region19: #{tpu_custom_call.1} parent=1 // pred_check_branch
      %47 = sbr.rel (0) target = $region21
    $region20: #{tpu_custom_call.1} parent=1 // pred_region
      _
    $region21: #{tpu_custom_call.1} parent=1 // pred_fallthru
      _
    // Predicated region
    $region22: #{tpu_custom_call.1} parent=1 // pred_check
      _
    $region23: #{tpu_custom_call.1} parent=1 // pred_check_branch
      %49 = sbr.rel (0) target = $region25
    $region24: #{tpu_custom_call.1} parent=1 // pred_region
      _
    $region25: #{tpu_custom_call.1} parent=1 // pred_fallthru
      _
    // Predicated region
    $region26: #{tpu_custom_call.1} parent=1 // pred_check
      _
    $region27: #{tpu_custom_call.1} parent=1 // pred_check_branch
      %51 = sbr.rel (0) target = $region29
    $region28: #{tpu_custom_call.1} parent=1 // pred_region
      _
    $region29: #{tpu_custom_call.1} parent=1 // pred_fallthru
      _
    // Predicated region
    $region30: #{tpu_custom_call.1} parent=1 // pred_check
      _
    $region31: #{tpu_custom_call.1} parent=1 // pred_check_branch
      %53 = sbr.rel (0) target = $region33
    $region32: #{tpu_custom_call.1} parent=1 // pred_region
      _
    $region33: #{tpu_custom_call.1} parent=1 // pred_fallthru
      _
    // Predicated region
    $region34: #{tpu_custom_call.1} parent=1 // pred_check
      _
    $region35: #{tpu_custom_call.1} parent=1 // pred_check_branch
      %55 = sbr.rel (0) target = $region37
    $region36: #{tpu_custom_call.1} parent=1 // pred_region
      _
    $region37: #{tpu_custom_call.1} parent=1 // pred_fallthru
      _
    // Predicated region
    $region38: #{tpu_custom_call.1} parent=1 // pred_check
      _
    $region39: #{tpu_custom_call.1} parent=1 // pred_check_branch
      %57 = sbr.rel (0) target = $region41
    $region40: #{tpu_custom_call.1} parent=1 // pred_region
      %s59 = ssub.s32 2048, 2048
      %60 = vsyncadd [#allocation6], %s59
      %s61 = sshll.u32 [#allocation7], 4
      %s62 = int_to_ptr.vmem [resolvable:$true] %s61
      %67 = dma.hbm_to_vmem [thread:$0]  %s9, 2048, %s62, [#allocation6], 128, 128, 8
    $region41: #{tpu_custom_call.1} parent=1 // pred_fallthru
      _
    // Predicated region
    $region42: #{tpu_custom_call.1} parent=1 // pred_check
      _
    $region43: #{tpu_custom_call.1} parent=1 // pred_check_branch
      %69 = sbr.rel (0) target = $region45
    $region44: #{tpu_custom_call.1} parent=1 // pred_region
      %70 = dma.done [#allocation3], 3072
    $region45: #{tpu_custom_call.1} parent=1 // pred_fallthru
      _
    // Predicated region
    $region46: #{tpu_custom_call.1} parent=1 // pred_check
      _
    $region47: #{tpu_custom_call.1} parent=1 // pred_check_branch
      %72 = sbr.rel (0) target = $region49
    $region48: #{tpu_custom_call.1} parent=1 // pred_region
      %73 = dma.done [#allocation6], 6144
    $region49: #{tpu_custom_call.1} parent=1 // pred_fallthru
      _
    // Predicated region
    $region50: #{tpu_custom_call.1} parent=1 // pred_check
      _
    $region51: #{tpu_custom_call.1} parent=1 // pred_check_branch
      %75 = sbr.rel (0) target = $region53
    $region52: #{tpu_custom_call.1} parent=1 // pred_region
      %76 = dma.done [#allocation6], 2048
    $region53: #{tpu_custom_call.1} parent=1 // pred_fallthru
      _
    %v77 = vld [vmem:[%s0] sm:$0xff]
    %v78 = vld [vmem:[%s0 + $0x8] sm:$0xff]
    %v79 = vld [vmem:[%s0 + $0x10] sm:$0xff]
    %v80 = vld [vmem:[%s0 + $0x18] sm:$0xff]
    %v81 = vld [vmem:[%s0 + $0x20] sm:$0xff]
    %v82 = vld [vmem:[%s0 + $0x28] sm:$0xff]
    %v83 = vld [vmem:[%s0 + $0x30] sm:$0xff]
    %v84 = vld [vmem:[%s0 + $0x38] sm:$0xff]
    %v85 = vld [vmem:[#allocation2] sm:$0xff]
    %v86 = vld [vmem:[#allocation2 + $0x8] sm:$0xff]
    %v87 = vld [vmem:[#allocation2 + $0x10] sm:$0xff]
    %v88 = vld [vmem:[#allocation2 + $0x18] sm:$0xff]
    %v89 = vld [vmem:[#allocation2 + $0x20] sm:$0xff]
    %v90 = vld [vmem:[#allocation2 + $0x28] sm:$0xff]
    %v91 = vld [vmem:[#allocation2 + $0x30] sm:$0xff]
    %v92 = vld [vmem:[#allocation2 + $0x38] sm:$0xff]
    %v93 = vld [vmem:[#allocation2 + $0x40] sm:$0xff]
    %v94 = vld [vmem:[#allocation2 + $0x48] sm:$0xff]
    %v95 = vld [vmem:[#allocation2 + $0x50] sm:$0xff]
    %v96 = vld [vmem:[#allocation2 + $0x58] sm:$0xff]
    %v97 = vld [vmem:[#allocation2 + $0x60] sm:$0xff]
    %v98 = vld [vmem:[#allocation2 + $0x68] sm:$0xff]
    %v99 = vld [vmem:[#allocation2 + $0x70] sm:$0xff]
    %v100 = vld [vmem:[#allocation2 + $0x78] sm:$0xff]
    %v101 = vld [vmem:[#allocation2 + $0x80] sm:$0xff]
    %v102 = vld [vmem:[#allocation2 + $0x88] sm:$0xff]
    %v103 = vld [vmem:[#allocation2 + $0x90] sm:$0xff]
    %v104 = vld [vmem:[#allocation2 + $0x98] sm:$0xff]
    %v105 = vld [vmem:[#allocation2 + $0xa0] sm:$0xff]
    %v106 = vld [vmem:[#allocation2 + $0xa8] sm:$0xff]
    %v107 = vld [vmem:[#allocation2 + $0xb0] sm:$0xff]
    %v108 = vld [vmem:[#allocation2 + $0xb8] sm:$0xff]
    %vm109 = vcmask 523264
    %v111 = vsel %vm109, %v78, 0
    %v114 = vsel %vm109, %v80, 0
    %v117 = vsel %vm109, %v82, 0
    %v120 = vsel %vm109, %v84, 0
    %122 = vmatprep.subr.mxu0 0.0
    %123 = vmatpush1.msra.mxu0 %v85
    %124 = vmatprep.subr.mxu0 0.0
    %125 = vmatpush1.msra.mxu0 %v86
    %126 = vmatprep.subr.mxu0 0.0
    %127 = vmatpush1.msra.mxu0 %v87
    %128 = vmatprep.subr.mxu0 0.0
    %129 = vmatpush1.msra.mxu0 %v88
    %130 = vmatprep.subr.mxu0 0.0
    %131 = vmatpush1.msra.mxu0 %v89
    %132 = vmatprep.subr.mxu0 0.0
    %133 = vmatpush1.msra.mxu0 %v90
    %134 = vmatprep.subr.mxu0 0.0
    %135 = vmatpush1.msra.mxu0 %v91
    %136 = vmatprep.subr.mxu0 0.0
    %137 = vmatpush1.msra.mxu0 %v92
    %138 = vmatprep.subr.mxu0 0.0
    %139 = vmatpush1.msra.mxu0 %v93
    %140 = vmatprep.subr.mxu0 0.0
    %141 = vmatpush1.msra.mxu0 %v94
    %142 = vmatprep.subr.mxu0 0.0
    %143 = vmatpush1.msra.mxu0 %v95
    %144 = vmatprep.subr.mxu0 0.0
    %145 = vmatpush1.msra.mxu0 %v96
    %146 = vmatprep.subr.mxu0 0.0
    %147 = vmatpush1.msra.mxu0 %v97
    %148 = vmatprep.subr.mxu0 0.0
    %149 = vmatpush1.msra.mxu0 %v98
    %150 = vmatprep.subr.mxu0 0.0
    %151 = vmatpush1.msra.mxu0 %v99
    %152 = vmatprep.subr.mxu0 0.0
    %153 = vmatpush1.msra.mxu0 %v100
    %154 = vmatprep.subr.mxu0 0.0
    %155 = vmatpush1.msra.mxu0 %v101
    %156 = vmatprep.subr.mxu0 0.0
    %157 = vmatpush1.msra.mxu0 %v102
    %158 = vmatprep.subr.mxu0 0.0
    %159 = vmatpush1.msra.mxu0 %v103
    %160 = vmatprep.subr.mxu0 0.0
    %161 = vmatpush1.msra.mxu0 %v104
    %162 = vmatprep.subr.mxu0 0.0
    %163 = vmatpush1.msra.mxu0 %v105
    %164 = vmatprep.subr.mxu0 0.0
    %165 = vmatpush1.msra.mxu0 %v106
    %166 = vmatprep.subr.mxu0 0.0
    %167 = vmatpush1.msra.mxu0 %v107
    %168 = vmatprep.subr.mxu0 0.0
    %169 = vmatpush1.msra.mxu0 %v108
    %170 = vmatprep.subr.mxu0 0.0
    %171 = vmatpush1.msra.mxu0 0.0
    %172 = vmatprep.subr.mxu0 0.0
    %173 = vmatpush1.msra.mxu0 0.0
    %174 = vmatprep.subr.mxu0 0.0
    %175 = vmatpush1.msra.mxu0 0.0
    %176 = vmatprep.subr.mxu0 0.0
    %177 = vmatpush1.msra.mxu0 0.0
    %178 = vmatprep.subr.mxu0 0.0
    %179 = vmatpush1.msra.mxu0 0.0
    %180 = vmatprep.subr.mxu0 0.0
    %181 = vmatpush1.msra.mxu0 0.0
    %182 = vmatprep.subr.mxu0 0.0
    %183 = vmatpush1.msra.mxu0 0.0
    %184 = vmatprep.subr.mxu0 0.0
    %185 = vmatpush1.msra.mxu0 0.0
    %186 = vmatprep.mubr.f32.mxu0 %v111
    %187 = vmatmul.mubr.f32.gmra.mrb[0].mxu0 %v77
    %v188 = vpop.f32.mrb[0].mxu0
    %v189 = vadd.f32 0.0, %v188
    %v190 = vpop.f32.mrb[0].mxu0
    %191 = vmatprep.mubr.f32.mxu0 %v114
    %192 = vmatmul.mubr.f32.gmra.mrb[0].mxu0 %v79
    %v193 = vpop.f32.mrb[0].mxu0
    %v194 = vadd.f32 0.0, %v193
    %v195 = vpop.f32.mrb[0].mxu0
    %196 = vmatprep.mubr.f32.mxu0 %v117
    %197 = vmatmul.mubr.f32.gmra.mrb[0].mxu0 %v81
    %v198 = vpop.f32.mrb[0].mxu0
    %v199 = vadd.f32 0.0, %v198
    %v200 = vpop.f32.mrb[0].mxu0
    %201 = vmatprep.mubr.f32.mxu0 %v120
    %202 = vmatmul.mubr.f32.gmra.mrb[0].mxu0 %v83
    %v203 = vpop.f32.mrb[0].mxu0
    %v204 = vadd.f32 0.0, %v203
    %v205 = vpop.f32.mrb[0].mxu0
    %206 = vdwg.mxu0
    %v207 = vmul.f32 %v189, %v189
    %v208 = vmul.f32 %v194, %v194
    %v209 = vmul.f32 %v199, %v199
    %v210 = vmul.f32 %v204, %v204
    %v211 = vadd.f32 %v189, %v194
    %v212 = vadd.f32 %v211, %v199
    %v213 = vadd.f32 %v212, %v204
    %v214 = vrot.slane %v213, 4
    %v215 = vadd.f32 %v213, %v214
    %v216 = vrot.slane %v215, 2
    %v217 = vadd.f32 %v215, %v216
    %v218 = vrot.slane %v217, 1
    %v219 = vadd.f32 %v217, %v218
    %v220 = vadd.f32 %v207, %v208
    %v221 = vadd.f32 %v220, %v209
    %v222 = vadd.f32 %v221, %v210
    %v223 = vrot.slane %v222, 4
    %v224 = vadd.f32 %v222, %v223
    %v225 = vrot.slane %v224, 2
    %v226 = vadd.f32 %v224, %v225
    %v227 = vrot.slane %v226, 1
    %v228 = vadd.f32 %v226, %v227
    %v229 = vld [vmem:[#allocation7] sm:$0xff]
    %v230 = vld [vmem:[#allocation7 + $0x8] sm:$0xff]
    %v231 = vld [vmem:[#allocation7 + $0x10] sm:$0xff]
    %v232 = vld [vmem:[#allocation7 + $0x18] sm:$0xff]
    %v233 = vld [vmem:[#allocation7 + $0x20] sm:$0xff]
    %v234 = vld [vmem:[#allocation7 + $0x28] sm:$0xff]
    %v235 = vld [vmem:[#allocation7 + $0x30] sm:$0xff]
    %v236 = vld [vmem:[#allocation7 + $0x38] sm:$0xff]
    %v237 = vld [vmem:[#allocation7 + $0x40] sm:$0xff]
    %v238 = vld [vmem:[#allocation7 + $0x48] sm:$0xff]
    %v239 = vld [vmem:[#allocation7 + $0x50] sm:$0xff]
    %v240 = vld [vmem:[#allocation7 + $0x58] sm:$0xff]
    %v241 = vld [vmem:[#allocation7 + $0x60] sm:$0xff]
    %v242 = vld [vmem:[#allocation7 + $0x68] sm:$0xff]
    %v243 = vld [vmem:[#allocation7 + $0x70] sm:$0xff]
    %v244 = vld [vmem:[#allocation7 + $0x78] sm:$0xff]
    %vm247 = vcmask 1041409
    %v248 = vsel %vm247, %v228, %v219
    %250 = vmatprep.subr.mxu0 0.0
    %251 = vmatpush1.msra.mxu0 %v229
    %252 = vmatprep.subr.mxu0 0.0
    %253 = vmatpush1.msra.mxu0 %v230
    %254 = vmatprep.subr.mxu0 0.0
    %255 = vmatpush1.msra.mxu0 %v231
    %256 = vmatprep.subr.mxu0 0.0
    %257 = vmatpush1.msra.mxu0 %v232
    %258 = vmatprep.subr.mxu0 0.0
    %259 = vmatpush1.msra.mxu0 %v233
    %260 = vmatprep.subr.mxu0 0.0
    %261 = vmatpush1.msra.mxu0 %v234
    %262 = vmatprep.subr.mxu0 0.0
    %263 = vmatpush1.msra.mxu0 %v235
    %264 = vmatprep.subr.mxu0 0.0
    %265 = vmatpush1.msra.mxu0 %v236
    %266 = vmatprep.subr.mxu0 0.0
    %267 = vmatpush1.msra.mxu0 %v237
    %268 = vmatprep.subr.mxu0 0.0
    %269 = vmatpush1.msra.mxu0 %v238
    %270 = vmatprep.subr.mxu0 0.0
    %271 = vmatpush1.msra.mxu0 %v239
    %272 = vmatprep.subr.mxu0 0.0
    %273 = vmatpush1.msra.mxu0 %v240
    %274 = vmatprep.subr.mxu0 0.0
    %275 = vmatpush1.msra.mxu0 %v241
    %276 = vmatprep.subr.mxu0 0.0
    %277 = vmatpush1.msra.mxu0 %v242
    %278 = vmatprep.subr.mxu0 0.0
    %279 = vmatpush1.msra.mxu0 %v243
    %280 = vmatprep.subr.mxu0 0.0
    %281 = vmatpush1.msra.mxu0 %v244
    %282 = vmatprep.subr.mxu0 0.0
    %283 = vmatpush1.msra.mxu0 0.0
    %284 = vmatprep.subr.mxu0 0.0
    %285 = vmatpush1.msra.mxu0 0.0
    %286 = vmatprep.subr.mxu0 0.0
    %287 = vmatpush1.msra.mxu0 0.0
    %288 = vmatprep.subr.mxu0 0.0
    %289 = vmatpush1.msra.mxu0 0.0
    %290 = vmatprep.subr.mxu0 0.0
    %291 = vmatpush1.msra.mxu0 0.0
    %292 = vmatprep.subr.mxu0 0.0
    %293 = vmatpush1.msra.mxu0 0.0
    %294 = vmatprep.subr.mxu0 0.0
    %295 = vmatpush1.msra.mxu0 0.0
    %296 = vmatprep.subr.mxu0 0.0
    %297 = vmatpush1.msra.mxu0 0.0
    %298 = vmatprep.subr.mxu0 0.0
    %299 = vmatpush1.msra.mxu0 0.0
    %300 = vmatprep.subr.mxu0 0.0
    %301 = vmatpush1.msra.mxu0 0.0
    %302 = vmatprep.subr.mxu0 0.0
    %303 = vmatpush1.msra.mxu0 0.0
    %304 = vmatprep.subr.mxu0 0.0
    %305 = vmatpush1.msra.mxu0 0.0
    %306 = vmatprep.subr.mxu0 0.0
    %307 = vmatpush1.msra.mxu0 0.0
    %308 = vmatprep.subr.mxu0 0.0
    %309 = vmatpush1.msra.mxu0 0.0
    %310 = vmatprep.subr.mxu0 0.0
    %311 = vmatpush1.msra.mxu0 0.0
    %312 = vmatprep.subr.mxu0 0.0
    %313 = vmatpush1.msra.mxu0 0.0
    %314 = vmatprep.mubr.f32.mxu0 0.0
    %315 = vmatmul.mubr.f32.gmra.mrb[0].mxu0 %v248
    %v316 = vpop.f32.mrb[0].mxu0
    %v317 = vadd.f32 0.0, %v316
    %v318 = vpop.f32.mrb[0].mxu0
    %319 = vdwg.mxu0
    %v320 = vmul.f32 %v317, 0.001953125
    %v321 = vmul.f32 %v320, %v320
    %v323 = vrot.slane %v321, 7
    %v325 = vsub.f32 %v320, %v323
    %v326 = vld [vmem:[%s3] sm:$0x1]
    %v327 = vadd.f32 %v325, 1e-05
    %v328 = vrsqrt.pop %v327
    %v331 = vunpack.c.l.s4 1966171168
    %v332 = vunpack.c.0.s8 %v331
    %v333 = vlaneseq
    %v334 = vshrl.u32 %v333, 7
    %v335 = vsub.s32 %v332, %v334
    %v336 = vrot.slane %v328, %v335
    %v337 = vcombine.high %v336, %v336
    %v339 = vunpack.c.l.s4 1966171168
    %v340 = vunpack.c.0.s8 %v339
    %v341 = vlaneseq
    %v342 = vshrl.u32 %v341, 7
    %v343 = vsub.s32 %v340, %v342
    %v344 = vrot.slane %v337, %v343
    %v346 = vmul.f32 %v326, %v344
    %v347 = vld [vmem:[%s4] sm:$0x1]
    %v348 = vmul.f32 %v320, %v346
    %v349 = vsub.f32 %v347, %v348
    %v351 = vlaneseq
    %v352 = vshrl.u32 %v351, 7
    %v353 = vsub.s32 0, %v352
    %v354 = vrot.slane %v346, %v353
    %v356 = vmul.f32 %v189, %v354
    %v357 = vmul.f32 %v194, %v354
    %v358 = vmul.f32 %v199, %v354
    %v359 = vmul.f32 %v204, %v354
    %v361 = vlaneseq
    %v362 = vshrl.u32 %v361, 7
    %v363 = vsub.s32 0, %v362
    %v364 = vrot.slane %v349, %v363
    %v366 = vadd.f32 %v356, %v364
    %v367 = vadd.f32 %v357, %v364
    %v368 = vadd.f32 %v358, %v364
    %v369 = vadd.f32 %v359, %v364
    %vm370 = vcmp.gt.f32.partialorder %v366, 0.0
    %vm371 = vcmp.gt.f32.partialorder %v367, 0.0
    %vm372 = vcmp.gt.f32.partialorder %v368, 0.0
    %vm373 = vcmp.gt.f32.partialorder %v369, 0.0
    %v374 = vmul.f32 %v366, 0.01
    %v375 = vmul.f32 %v367, 0.01
    %v376 = vmul.f32 %v368, 0.01
    %v377 = vmul.f32 %v369, 0.01
    %v378 = vsel %vm370, %v366, %v374
    %v379 = vsel %vm371, %v367, %v375
    %v380 = vsel %vm372, %v368, %v376
    %v381 = vsel %vm373, %v369, %v377
    %v382 = vrot.slane %v378, 7
    %v383 = vrot.slane %v379, 7
    %v384 = vrot.slane %v380, 7
    %v385 = vrot.slane %v381, 7
    %v386 = vlaneseq
    %v387 = vshrl.u32 %v386, 7
    %vm388 = vcmp.lt.s32.totalorder %v387, 1
    %v389 = vsel %vm388, %v384, %v385
    %v390 = vsel %vm388, %v383, %v384
    %v391 = vsel %vm388, %v382, %v383
    %v392 = vsel %vm388, %v385, %v382
    %v393 = vld [vmem:[%s7] sm:$0xff]
    %v394 = vld [vmem:[%s7 + $0x8] sm:$0xff]
    %v395 = vld [vmem:[%s7 + $0x10] sm:$0xff]
    %v396 = vld [vmem:[%s7 + $0x18] sm:$0xff]
    %398 = vset.pattern.permute.xlu0 0
    %399 = vperm.xlu0 %398, %v393
    %v400 = vpop.permute.xlu0 %399
    %403 = vset.pattern.permute.xlu0 0
    %404 = vperm.xlu0 %403, %v394
    %v405 = vpop.permute.xlu0 %404
    %408 = vset.pattern.permute.xlu0 0
    %409 = vperm.xlu0 %408, %v395
    %v410 = vpop.permute.xlu0 %409
    %413 = vset.pattern.permute.xlu0 0
    %414 = vperm.xlu0 %413, %v396
    %v415 = vpop.permute.xlu0 %414
    %v417 = vmul.f32 %v392, %v400
    %v418 = vmul.f32 %v391, %v405
    %v419 = vmul.f32 %v390, %v410
    %v420 = vmul.f32 %v389, %v415
    %v421 = vrot.slane %v378, 1
    %v422 = vrot.slane %v379, 1
    %v423 = vrot.slane %v380, 1
    %v424 = vrot.slane %v381, 1
    %vm425 = vcmp.lt.s32.totalorder %v387, 7
    %v426 = vsel %vm425, %v423, %v424
    %v427 = vsel %vm425, %v422, %v423
    %v428 = vsel %vm425, %v421, %v422
    %v429 = vsel %vm425, %v424, %v421
    %v430 = vld [vmem:[%s8] sm:$0xff]
    %v431 = vld [vmem:[%s8 + $0x8] sm:$0xff]
    %v432 = vld [vmem:[%s8 + $0x10] sm:$0xff]
    %v433 = vld [vmem:[%s8 + $0x18] sm:$0xff]
    %435 = vset.pattern.permute.xlu0 0
    %436 = vperm.xlu0 %435, %v430
    %v437 = vpop.permute.xlu0 %436
    %440 = vset.pattern.permute.xlu0 0
    %441 = vperm.xlu0 %440, %v431
    %v442 = vpop.permute.xlu0 %441
    %445 = vset.pattern.permute.xlu0 0
    %446 = vperm.xlu0 %445, %v432
    %v447 = vpop.permute.xlu0 %446
    %450 = vset.pattern.permute.xlu0 0
    %451 = vperm.xlu0 %450, %v433
    %v452 = vpop.permute.xlu0 %451
    %v454 = vmul.f32 %v428, %v437
    %v455 = vmul.f32 %v427, %v442
    %v456 = vmul.f32 %v426, %v447
    %v457 = vmul.f32 %v429, %v452
    %v458 = vld [vmem:[#allocation5] sm:$0xff]
    %v459 = vld [vmem:[#allocation5 + $0x8] sm:$0xff]
    %v460 = vld [vmem:[#allocation5 + $0x10] sm:$0xff]
    %v461 = vld [vmem:[#allocation5 + $0x18] sm:$0xff]
    %v462 = vld [vmem:[#allocation5 + $0x20] sm:$0xff]
    %v463 = vld [vmem:[#allocation5 + $0x28] sm:$0xff]
    %v464 = vld [vmem:[#allocation5 + $0x30] sm:$0xff]
    %v465 = vld [vmem:[#allocation5 + $0x38] sm:$0xff]
    %v466 = vld [vmem:[#allocation5 + $0x40] sm:$0xff]
    %v467 = vld [vmem:[#allocation5 + $0x48] sm:$0xff]
    %v468 = vld [vmem:[#allocation5 + $0x50] sm:$0xff]
    %v469 = vld [vmem:[#allocation5 + $0x58] sm:$0xff]
    %v470 = vld [vmem:[#allocation5 + $0x60] sm:$0xff]
    %v471 = vld [vmem:[#allocation5 + $0x68] sm:$0xff]
    %v472 = vld [vmem:[#allocation5 + $0x70] sm:$0xff]
    %v473 = vld [vmem:[#allocation5 + $0x78] sm:$0xff]
    %v474 = vld [vmem:[#allocation5 + $0x80] sm:$0xff]
    %v475 = vld [vmem:[#allocation5 + $0x88] sm:$0xff]
    %v476 = vld [vmem:[#allocation5 + $0x90] sm:$0xff]
    %v477 = vld [vmem:[#allocation5 + $0x98] sm:$0xff]
    %v478 = vld [vmem:[#allocation5 + $0xa0] sm:$0xff]
    %v479 = vld [vmem:[#allocation5 + $0xa8] sm:$0xff]
    %v480 = vld [vmem:[#allocation5 + $0xb0] sm:$0xff]
    %v481 = vld [vmem:[#allocation5 + $0xb8] sm:$0xff]
    %v482 = vld [vmem:[#allocation5 + $0xc0] sm:$0xff]
    %v483 = vld [vmem:[#allocation5 + $0xc8] sm:$0xff]
    %v484 = vld [vmem:[#allocation5 + $0xd0] sm:$0xff]
    %v485 = vld [vmem:[#allocation5 + $0xd8] sm:$0xff]
    %v486 = vld [vmem:[#allocation5 + $0xe0] sm:$0xff]
    %v487 = vld [vmem:[#allocation5 + $0xe8] sm:$0xff]
    %v488 = vld [vmem:[#allocation5 + $0xf0] sm:$0xff]
    %v489 = vld [vmem:[#allocation5 + $0xf8] sm:$0xff]
    %v490 = vld [vmem:[#allocation5 + $0x100] sm:$0xff]
    %v491 = vld [vmem:[#allocation5 + $0x108] sm:$0xff]
    %v492 = vld [vmem:[#allocation5 + $0x110] sm:$0xff]
    %v493 = vld [vmem:[#allocation5 + $0x118] sm:$0xff]
    %v494 = vld [vmem:[#allocation5 + $0x120] sm:$0xff]
    %v495 = vld [vmem:[#allocation5 + $0x128] sm:$0xff]
    %v496 = vld [vmem:[#allocation5 + $0x130] sm:$0xff]
    %v497 = vld [vmem:[#allocation5 + $0x138] sm:$0xff]
    %v498 = vld [vmem:[#allocation5 + $0x140] sm:$0xff]
    %v499 = vld [vmem:[#allocation5 + $0x148] sm:$0xff]
    %v500 = vld [vmem:[#allocation5 + $0x150] sm:$0xff]
    %v501 = vld [vmem:[#allocation5 + $0x158] sm:$0xff]
    %v502 = vld [vmem:[#allocation5 + $0x160] sm:$0xff]
    %v503 = vld [vmem:[#allocation5 + $0x168] sm:$0xff]
    %v504 = vld [vmem:[#allocation5 + $0x170] sm:$0xff]
    %v505 = vld [vmem:[#allocation5 + $0x178] sm:$0xff]
    %506 = vmatprep.subr.mxu0 0.0
    %507 = vmatpush1.msra.mxu0 %v458
    %508 = vmatprep.subr.mxu0 0.0
    %509 = vmatpush1.msra.mxu0 %v459
    %510 = vmatprep.subr.mxu0 0.0
    %511 = vmatpush1.msra.mxu0 %v460
    %512 = vmatprep.subr.mxu0 0.0
    %513 = vmatpush1.msra.mxu0 %v461
    %514 = vmatprep.subr.mxu0 0.0
    %515 = vmatpush1.msra.mxu0 %v462
    %516 = vmatprep.subr.mxu0 0.0
    %517 = vmatpush1.msra.mxu0 %v463
    %518 = vmatprep.subr.mxu0 0.0
    %519 = vmatpush1.msra.mxu0 %v464
    %520 = vmatprep.subr.mxu0 0.0
    %521 = vmatpush1.msra.mxu0 %v465
    %522 = vmatprep.subr.mxu0 0.0
    %523 = vmatpush1.msra.mxu0 %v466
    %524 = vmatprep.subr.mxu0 0.0
    %525 = vmatpush1.msra.mxu0 %v467
    %526 = vmatprep.subr.mxu0 0.0
    %527 = vmatpush1.msra.mxu0 %v468
    %528 = vmatprep.subr.mxu0 0.0
    %529 = vmatpush1.msra.mxu0 %v469
    %530 = vmatprep.subr.mxu0 0.0
    %531 = vmatpush1.msra.mxu0 %v470
    %532 = vmatprep.subr.mxu0 0.0
    %533 = vmatpush1.msra.mxu0 %v471
    %534 = vmatprep.subr.mxu0 0.0
    %535 = vmatpush1.msra.mxu0 %v472
    %536 = vmatprep.subr.mxu0 0.0
    %537 = vmatpush1.msra.mxu0 %v473
    %538 = vmatprep.subr.mxu0 0.0
    %539 = vmatpush1.msra.mxu0 %v474
    %540 = vmatprep.subr.mxu0 0.0
    %541 = vmatpush1.msra.mxu0 %v475
    %542 = vmatprep.subr.mxu0 0.0
    %543 = vmatpush1.msra.mxu0 %v476
    %544 = vmatprep.subr.mxu0 0.0
    %545 = vmatpush1.msra.mxu0 %v477
    %546 = vmatprep.subr.mxu0 0.0
    %547 = vmatpush1.msra.mxu0 %v478
    %548 = vmatprep.subr.mxu0 0.0
    %549 = vmatpush1.msra.mxu0 %v479
    %550 = vmatprep.subr.mxu0 0.0
    %551 = vmatpush1.msra.mxu0 %v480
    %552 = vmatprep.subr.mxu0 0.0
    %553 = vmatpush1.msra.mxu0 %v481
    %554 = vmatprep.subr.mxu0 0.0
    %555 = vmatpush1.msra.mxu0 %v482
    %556 = vmatprep.subr.mxu0 0.0
    %557 = vmatpush1.msra.mxu0 %v483
    %558 = vmatprep.subr.mxu0 0.0
    %559 = vmatpush1.msra.mxu0 %v484
    %560 = vmatprep.subr.mxu0 0.0
    %561 = vmatpush1.msra.mxu0 %v485
    %562 = vmatprep.subr.mxu0 0.0
    %563 = vmatpush1.msra.mxu0 %v486
    %564 = vmatprep.subr.mxu0 0.0
    %565 = vmatpush1.msra.mxu0 %v487
    %566 = vmatprep.subr.mxu0 0.0
    %567 = vmatpush1.msra.mxu0 %v488
    %568 = vmatprep.subr.mxu0 0.0
    %569 = vmatpush1.msra.mxu0 %v489
    %570 = vmatprep.mubr.f32.mxu0 %v378
    %571 = vmatmul.mubr.f32.gmra.mrb[0].mxu0 %v417
    %v572 = vpop.f32.mrb[0].mxu0
    %v573 = vadd.f32 0.0, %v572
    %v574 = vpop.f32.mrb[0].mxu0
    %575 = vmatprep.mubr.f32.mxu0 %v379
    %576 = vmatmul.mubr.f32.gmra.mrb[0].mxu0 %v418
    %v577 = vpop.f32.mrb[0].mxu0
    %v578 = vadd.f32 0.0, %v577
    %v579 = vpop.f32.mrb[0].mxu0
    %580 = vmatprep.mubr.f32.mxu0 %v380
    %581 = vmatmul.mubr.f32.gmra.mrb[0].mxu0 %v419
    %v582 = vpop.f32.mrb[0].mxu0
    %v583 = vadd.f32 0.0, %v582
    %v584 = vpop.f32.mrb[0].mxu0
    %585 = vmatprep.mubr.f32.mxu0 %v381
    %586 = vmatmul.mubr.f32.gmra.mrb[0].mxu0 %v420
    %v587 = vpop.f32.mrb[0].mxu0
    %v588 = vadd.f32 0.0, %v587
    %v589 = vpop.f32.mrb[0].mxu0
    %590 = vdwg.mxu0
    %591 = vmatprep.subr.mxu0 0.0
    %592 = vmatpush1.msra.mxu0 %v490
    %593 = vmatprep.subr.mxu0 0.0
    %594 = vmatpush1.msra.mxu0 %v491
    %595 = vmatprep.subr.mxu0 0.0
    %596 = vmatpush1.msra.mxu0 %v492
    %597 = vmatprep.subr.mxu0 0.0
    %598 = vmatpush1.msra.mxu0 %v493
    %599 = vmatprep.subr.mxu0 0.0
    %600 = vmatpush1.msra.mxu0 %v494
    %601 = vmatprep.subr.mxu0 0.0
    %602 = vmatpush1.msra.mxu0 %v495
    %603 = vmatprep.subr.mxu0 0.0
    %604 = vmatpush1.msra.mxu0 %v496
    %605 = vmatprep.subr.mxu0 0.0
    %606 = vmatpush1.msra.mxu0 %v497
    %607 = vmatprep.subr.mxu0 0.0
    %608 = vmatpush1.msra.mxu0 %v498
    %609 = vmatprep.subr.mxu0 0.0
    %610 = vmatpush1.msra.mxu0 %v499
    %611 = vmatprep.subr.mxu0 0.0
    %612 = vmatpush1.msra.mxu0 %v500
    %613 = vmatprep.subr.mxu0 0.0
    %614 = vmatpush1.msra.mxu0 %v501
    %615 = vmatprep.subr.mxu0 0.0
    %616 = vmatpush1.msra.mxu0 %v502
    %617 = vmatprep.subr.mxu0 0.0
    %618 = vmatpush1.msra.mxu0 %v503
    %619 = vmatprep.subr.mxu0 0.0
    %620 = vmatpush1.msra.mxu0 %v504
    %621 = vmatprep.subr.mxu0 0.0
    %622 = vmatpush1.msra.mxu0 %v505
    %623 = vmatprep.subr.mxu0 0.0
    %624 = vmatpush1.msra.mxu0 0.0
    %625 = vmatprep.subr.mxu0 0.0
    %626 = vmatpush1.msra.mxu0 0.0
    %627 = vmatprep.subr.mxu0 0.0
    %628 = vmatpush1.msra.mxu0 0.0
    %629 = vmatprep.subr.mxu0 0.0
    %630 = vmatpush1.msra.mxu0 0.0
    %631 = vmatprep.subr.mxu0 0.0
    %632 = vmatpush1.msra.mxu0 0.0
    %633 = vmatprep.subr.mxu0 0.0
    %634 = vmatpush1.msra.mxu0 0.0
    %635 = vmatprep.subr.mxu0 0.0
    %636 = vmatpush1.msra.mxu0 0.0
    %637 = vmatprep.subr.mxu0 0.0
    %638 = vmatpush1.msra.mxu0 0.0
    %639 = vmatprep.subr.mxu0 0.0
    %640 = vmatpush1.msra.mxu0 0.0
    %641 = vmatprep.subr.mxu0 0.0
    %642 = vmatpush1.msra.mxu0 0.0
    %643 = vmatprep.subr.mxu0 0.0
    %644 = vmatpush1.msra.mxu0 0.0
    %645 = vmatprep.subr.mxu0 0.0
    %646 = vmatpush1.msra.mxu0 0.0
    %647 = vmatprep.subr.mxu0 0.0
    %648 = vmatpush1.msra.mxu0 0.0
    %649 = vmatprep.subr.mxu0 0.0
    %650 = vmatpush1.msra.mxu0 0.0
    %651 = vmatprep.subr.mxu0 0.0
    %652 = vmatpush1.msra.mxu0 0.0
    %653 = vmatprep.subr.mxu0 0.0
    %654 = vmatpush1.msra.mxu0 0.0
    %655 = vmatprep.mubr.f32.mxu0 0.0
    %656 = vmatmul.mubr.f32.gmra.mrb[0].mxu0 %v454
    %v657 = vpop.f32.mrb[0].mxu0
    %v658 = vadd.f32 %v573, %v657
    %v659 = vpop.f32.mrb[0].mxu0
    %660 = vmatprep.mubr.f32.mxu0 0.0
    %661 = vmatmul.mubr.f32.gmra.mrb[0].mxu0 %v455
    %v662 = vpop.f32.mrb[0].mxu0
    %v663 = vadd.f32 %v578, %v662
    %v664 = vpop.f32.mrb[0].mxu0
    %665 = vmatprep.mubr.f32.mxu0 0.0
    %666 = vmatmul.mubr.f32.gmra.mrb[0].mxu0 %v456
    %v667 = vpop.f32.mrb[0].mxu0
    %v668 = vadd.f32 %v583, %v667
    %v669 = vpop.f32.mrb[0].mxu0
    %670 = vmatprep.mubr.f32.mxu0 0.0
    %671 = vmatmul.mubr.f32.gmra.mrb[0].mxu0 %v457
    %v672 = vpop.f32.mrb[0].mxu0
    %v673 = vadd.f32 %v588, %v672
    %v674 = vpop.f32.mrb[0].mxu0
    %675 = vdwg.mxu0
    %v676 = vmul.f32 %v658, %v658
    %v677 = vmul.f32 %v663, %v663
    %v678 = vmul.f32 %v668, %v668
    %v679 = vmul.f32 %v673, %v673
    %v680 = vadd.f32 %v658, %v663
    %v681 = vadd.f32 %v680, %v668
    %v682 = vadd.f32 %v681, %v673
    %v683 = vrot.slane %v682, 4
    %v684 = vadd.f32 %v682, %v683
    %v685 = vrot.slane %v684, 2
    %v686 = vadd.f32 %v684, %v685
    %v687 = vrot.slane %v686, 1
    %v688 = vadd.f32 %v686, %v687
    %v689 = vadd.f32 %v676, %v677
    %v690 = vadd.f32 %v689, %v678
    %v691 = vadd.f32 %v690, %v679
    %v692 = vrot.slane %v691, 4
    %v693 = vadd.f32 %v691, %v692
    %v694 = vrot.slane %v693, 2
    %v695 = vadd.f32 %v693, %v694
    %v696 = vrot.slane %v695, 1
    %v697 = vadd.f32 %v695, %v696
    %v700 = vsel %vm247, %v697, %v688
    %702 = vmatprep.subr.mxu0 0.0
    %703 = vmatpush1.msra.mxu0 %v229
    %704 = vmatprep.subr.mxu0 0.0
    %705 = vmatpush1.msra.mxu0 %v230
    %706 = vmatprep.subr.mxu0 0.0
    %707 = vmatpush1.msra.mxu0 %v231
    %708 = vmatprep.subr.mxu0 0.0
    %709 = vmatpush1.msra.mxu0 %v232
    %710 = vmatprep.subr.mxu0 0.0
    %711 = vmatpush1.msra.mxu0 %v233
    %712 = vmatprep.subr.mxu0 0.0
    %713 = vmatpush1.msra.mxu0 %v234
    %714 = vmatprep.subr.mxu0 0.0
    %715 = vmatpush1.msra.mxu0 %v235
    %716 = vmatprep.subr.mxu0 0.0
    %717 = vmatpush1.msra.mxu0 %v236
    %718 = vmatprep.subr.mxu0 0.0
    %719 = vmatpush1.msra.mxu0 %v237
    %720 = vmatprep.subr.mxu0 0.0
    %721 = vmatpush1.msra.mxu0 %v238
    %722 = vmatprep.subr.mxu0 0.0
    %723 = vmatpush1.msra.mxu0 %v239
    %724 = vmatprep.subr.mxu0 0.0
    %725 = vmatpush1.msra.mxu0 %v240
    %726 = vmatprep.subr.mxu0 0.0
    %727 = vmatpush1.msra.mxu0 %v241
    %728 = vmatprep.subr.mxu0 0.0
    %729 = vmatpush1.msra.mxu0 %v242
    %730 = vmatprep.subr.mxu0 0.0
    %731 = vmatpush1.msra.mxu0 %v243
    %732 = vmatprep.subr.mxu0 0.0
    %733 = vmatpush1.msra.mxu0 %v244
    %734 = vmatprep.subr.mxu0 0.0
    %735 = vmatpush1.msra.mxu0 0.0
    %736 = vmatprep.subr.mxu0 0.0
    %737 = vmatpush1.msra.mxu0 0.0
    %738 = vmatprep.subr.mxu0 0.0
    %739 = vmatpush1.msra.mxu0 0.0
    %740 = vmatprep.subr.mxu0 0.0
    %741 = vmatpush1.msra.mxu0 0.0
    %742 = vmatprep.subr.mxu0 0.0
    %743 = vmatpush1.msra.mxu0 0.0
    %744 = vmatprep.subr.mxu0 0.0
    %745 = vmatpush1.msra.mxu0 0.0
    %746 = vmatprep.subr.mxu0 0.0
    %747 = vmatpush1.msra.mxu0 0.0
    %748 = vmatprep.subr.mxu0 0.0
    %749 = vmatpush1.msra.mxu0 0.0
    %750 = vmatprep.subr.mxu0 0.0
    %751 = vmatpush1.msra.mxu0 0.0
    %752 = vmatprep.subr.mxu0 0.0
    %753 = vmatpush1.msra.mxu0 0.0
    %754 = vmatprep.subr.mxu0 0.0
    %755 = vmatpush1.msra.mxu0 0.0
    %756 = vmatprep.subr.mxu0 0.0
    %757 = vmatpush1.msra.mxu0 0.0
    %758 = vmatprep.subr.mxu0 0.0
    %759 = vmatpush1.msra.mxu0 0.0
    %760 = vmatprep.subr.mxu0 0.0
    %761 = vmatpush1.msra.mxu0 0.0
    %762 = vmatprep.subr.mxu0 0.0
    %763 = vmatpush1.msra.mxu0 0.0
    %764 = vmatprep.subr.mxu0 0.0
    %765 = vmatpush1.msra.mxu0 0.0
    %766 = vmatprep.mubr.f32.mxu0 0.0
    %767 = vmatmul.mubr.f32.gmra.mrb[0].mxu0 %v700
    %v768 = vpop.f32.mrb[0].mxu0
    %v769 = vadd.f32 0.0, %v768
    %v770 = vpop.f32.mrb[0].mxu0
    %771 = vdwg.mxu0
    %v772 = vmul.f32 %v769, 0.001953125
    %v773 = vmul.f32 %v772, %v772
    %v775 = vrot.slane %v773, 7
    %v777 = vsub.f32 %v772, %v775
    %v778 = vld [vmem:[%s5] sm:$0x1]
    %v779 = vadd.f32 %v777, 1e-05
    %v780 = vrsqrt.pop %v779
    %v783 = vunpack.c.l.s4 1966171168
    %v784 = vunpack.c.0.s8 %v783
    %v785 = vlaneseq
    %v786 = vshrl.u32 %v785, 7
    %v787 = vsub.s32 %v784, %v786
    %v788 = vrot.slane %v780, %v787
    %v789 = vcombine.high %v788, %v788
    %v791 = vunpack.c.l.s4 1966171168
    %v792 = vunpack.c.0.s8 %v791
    %v793 = vlaneseq
    %v794 = vshrl.u32 %v793, 7
    %v795 = vsub.s32 %v792, %v794
    %v796 = vrot.slane %v789, %v795
    %v798 = vmul.f32 %v778, %v796
    %v799 = vld [vmem:[%s6] sm:$0x1]
    %v800 = vmul.f32 %v772, %v798
    %v801 = vsub.f32 %v799, %v800
    %v803 = vlaneseq
    %v804 = vshrl.u32 %v803, 7
    %v805 = vsub.s32 0, %v804
    %v806 = vrot.slane %v798, %v805
    %v808 = vmul.f32 %v658, %v806
    %v809 = vmul.f32 %v663, %v806
    %v810 = vmul.f32 %v668, %v806
    %v811 = vmul.f32 %v673, %v806
    %v813 = vlaneseq
    %v814 = vshrl.u32 %v813, 7
    %v815 = vsub.s32 0, %v814
    %v816 = vrot.slane %v801, %v815
    %v818 = vadd.f32 %v808, %v816
    %v819 = vadd.f32 %v809, %v816
    %v820 = vadd.f32 %v810, %v816
    %v821 = vadd.f32 %v811, %v816
    %vm822 = vcmp.gt.f32.partialorder %v818, 0.0
    %vm823 = vcmp.gt.f32.partialorder %v819, 0.0
    %vm824 = vcmp.gt.f32.partialorder %v820, 0.0
    %vm825 = vcmp.gt.f32.partialorder %v821, 0.0
    %v826 = vmul.f32 %v818, 0.01
    %v827 = vmul.f32 %v819, 0.01
    %v828 = vmul.f32 %v820, 0.01
    %v829 = vmul.f32 %v821, 0.01
    %v830 = vsel %vm822, %v818, %v826
    %v831 = vsel %vm823, %v819, %v827
    %v832 = vsel %vm824, %v820, %v828
    %v833 = vsel %vm825, %v821, %v829
    %834 = vst [vmem:[#allocation8] sm:$0xff] %v830
    %835 = vst [vmem:[#allocation8 + $0x8] sm:$0xff] %v831
    %836 = vst [vmem:[#allocation8 + $0x10] sm:$0xff] %v832
    %837 = vst [vmem:[#allocation8 + $0x18] sm:$0xff] %v833
    // Predicated region
    $region54: #{tpu_custom_call.1} parent=1 // pred_check
      _
    $region55: #{tpu_custom_call.1} parent=1 // pred_check_branch
      %839 = sbr.rel (0) target = $region57
    $region56: #{tpu_custom_call.1} parent=1 // pred_region
      %s841 = ssub.s32 512, 512
      %842 = vsyncadd [#allocation4], %s841
      %s843 = sshll.u32 [#allocation8], 4
      %s844 = int_to_ptr.vmem [resolvable:$true] %s843
      %849 = dma.vmem_to_hbm [thread:$0]  %s844, 512, %s10, [#allocation4], 128, 128, 8
    $region57: #{tpu_custom_call.1} parent=1 // pred_fallthru
      _
    // Predicated region
    $region58: #{tpu_custom_call.1} parent=1 // pred_check
      _
    $region59: #{tpu_custom_call.1} parent=1 // pred_check_branch
      %851 = sbr.rel (0) target = $region61
    $region60: #{tpu_custom_call.1} parent=1 // pred_region
      %852 = dma.done [#allocation4], 512
    $region61: #{tpu_custom_call.1} parent=1 // pred_fallthru
      _
    %853 = vsyncpa [#allocation3], 1
    %854 = vsyncpa [#allocation6], 1
    %855 = vsyncpa [#allocation4], 1

</llo_original>
